<compile_context>
chip_gen: v5e
topology: v5e:2x2
jax: 0.10.0
libtpu: 0.0.40
codegen_flags: <defaults>
</compile_context>

<pallas_src>
import math
import functools

import jax
import jax.numpy as jnp
from jax.experimental import pallas as pl
from jax.experimental.pallas import tpu as pltpu


def _round_up(x, m):
    return ((x + m - 1) // m) * m


def _choose_tm(batch, tm_max):
    """Static (shape-dependent) batch-tile selection."""
    b8 = _round_up(batch, 8)
    if b8 <= 256:
        return b8                      # tiny batch: one tile, zero grid overhead
    # Large batch: big tiles amortize the ~0.35us/step fixed overhead, but keep
    # at least 2 tiles so the "parallel" axis can shard across v7x's 2 TCs.
    tm = min(tm_max, _round_up(pl.cdiv(b8, 2), 128))
    return max(tm, 128)


def actor_kernel(obs_ref, w1_ref, b1_ref, w2_ref, b2_ref, w3_ref, b3_ref, out_ref):
    x = obs_ref[...]                                                   # (TM, ob) f32
    # fc1 + ReLU  (MXU matmul, f32 accumulate)
    h1 = jnp.dot(x, w1_ref[...], preferred_element_type=jnp.float32) + b1_ref[...]
    h1 = jnp.maximum(h1, 0.0)
    # fc2 + ReLU
    h2 = jnp.dot(h1, w2_ref[...], preferred_element_type=jnp.float32) + b2_ref[...]
    h2 = jnp.maximum(h2, 0.0)
    # fc3 (no activation)
    out = jnp.dot(h2, w3_ref[...], preferred_element_type=jnp.float32) + b3_ref[...]
    out_ref[...] = out.astype(out_ref.dtype)


@functools.partial(jax.jit, static_argnames=("tm_max",))
def actor_forward(obs, params, *, tm_max=512):
    w1, b1, w2, b2, w3, b3 = params
    B, ob_size = obs.shape
    hid = w1.shape[1]
    ac_size = w3.shape[1]

    tm = _choose_tm(B, tm_max)
    grid = (pl.cdiv(B, tm),)           # partial last tile is handled by Pallas

    out = pl.pallas_call(
        actor_kernel,
        out_shape=jax.ShapeDtypeStruct((B, ac_size), jnp.float32),
        grid=grid,
        in_specs=[
            # obs: tiled over batch; last block dim == full array dim (no padding pass).
            pl.BlockSpec((tm, ob_size), lambda i: (i, 0)),
            # Weights / biases: full-array blocks with constant index_maps
            # -> loaded once, VMEM-resident across all grid steps.
            pl.BlockSpec((ob_size, hid), lambda i: (0, 0)),   # w1
            pl.BlockSpec((1, hid), lambda i: (0, 0)),         # b1
            pl.BlockSpec((hid, hid), lambda i: (0, 0)),       # w2
            pl.BlockSpec((1, hid), lambda i: (0, 0)),         # b2
            pl.BlockSpec((hid, ac_size), lambda i: (0, 0)),   # w3
            pl.BlockSpec((1, ac_size), lambda i: (0, 0)),     # b3
        ],
        # Output written directly at (B, ac_size): only real columns reach HBM.
        out_specs=pl.BlockSpec((tm, ac_size), lambda i: (i, 0)),
        compiler_params=pltpu.CompilerParams(
            dimension_semantics=("parallel",),   # batch tiles shard across v7x's 2 TCs
        ),
    )(obs, w1, b1, w2, b2, w3, b3)
    return out


def init_linear(key, in_features, out_features):
    # Mirror nn.Linear default init: U(-1/sqrt(fan_in), 1/sqrt(fan_in)).
    kw, kb = jax.random.split(key)
    bound = 1.0 / math.sqrt(in_features)
    w = jax.random.uniform(kw, (in_features, out_features), jnp.float32, -bound, bound)
    b = jax.random.uniform(kb, (1, out_features), jnp.float32, -bound, bound)
    return w, b


def make_actor_params(key, ob_size, ac_size, hid_size=128):
    # Params are created once in the exact layout/dtype the kernel consumes
    # (no per-call pad/cast passes inside actor_forward).
    k1, k2, k3 = jax.random.split(key, 3)
    w1, b1 = init_linear(k1, ob_size, hid_size)
    w2, b2 = init_linear(k2, hid_size, hid_size)
    w3, b3 = init_linear(k3, hid_size, ac_size)
    return (w1, b1, w2, b2, w3, b3)


def ref_forward(obs, params):
    # Pure-JAX f32 reference (matches the PyTorch Actor forward).
    w1, b1, w2, b2, w3, b3 = params
    hp = jax.lax.Precision.HIGHEST
    h1 = jnp.maximum(jnp.dot(obs, w1, precision=hp) + b1, 0.0)
    h2 = jnp.maximum(jnp.dot(h1, w2, precision=hp) + b2, 0.0)
    return jnp.dot(h2, w3, precision=hp) + b3


if __name__ == "__main__":
    key = jax.random.PRNGKey(0)
    k_params, k_obs1, k_obs2 = jax.random.split(key, 3)

    # Shapes implied by the module: obs features, hidden=128, action dim.
    ob_size, ac_size, hid_size = 24, 6, 128
    params = make_actor_params(k_params, ob_size, ac_size, hid_size)

    # Case 1: small batch -> single tile (tm=200, grid=(1,)).
    obs_small = jax.random.normal(k_obs1, (200, ob_size), jnp.float32)
    out_small = actor_forward(obs_small, params)
    jax.block_until_ready(out_small)
    assert out_small.shape == (200, ac_size)
    assert jnp.allclose(out_small, ref_forward(obs_small, params), atol=1e-2, rtol=1e-2), \
        "mismatch vs JAX reference (single-tile case)"

    # Case 2: gridded batch with a partial last tile (B=300 -> tm=256, grid=(2,)).
    obs_big = jax.random.normal(k_obs2, (300, ob_size), jnp.float32)
    out_big = actor_forward(obs_big, params)
    jax.block_until_ready(out_big)
    assert out_big.shape == (300, ac_size)
    assert jnp.allclose(out_big, ref_forward(obs_big, params), atol=1e-2, rtol=1e-2), \
        "mismatch vs JAX reference (gridded case)"

    print("KERNEL_OK")
</pallas_src>

<mosaic_0001>
module attributes {stable_mosaic.version = 11 : i64} {
  func.func @actor_kernel(%arg0: i32, %arg1: memref<200x24xf32, #tpu.memory_space<vmem>>, %arg2: memref<24x128xf32, #tpu.memory_space<vmem>>, %arg3: memref<1x128xf32, #tpu.memory_space<vmem>>, %arg4: memref<128x128xf32, #tpu.memory_space<vmem>>, %arg5: memref<1x128xf32, #tpu.memory_space<vmem>>, %arg6: memref<128x6xf32, #tpu.memory_space<vmem>>, %arg7: memref<1x6xf32, #tpu.memory_space<vmem>>, %arg8: memref<200x6xf32, #tpu.memory_space<vmem>>) attributes {dimension_semantics = [#tpu.dimension_semantics<parallel>], iteration_bounds = array<i64: 1>, scalar_prefetch = 0 : i64, scratch_operands = 0 : i64, tpu.core_type = #tpu.core_type<tc>, window_params = [{transform_indices = @transform_0, window_bounds = array<i64: 200, 24>}, {pipeline_mode = #tpu.pipeline_mode<synchronous>, transform_indices = @transform_1, window_bounds = array<i64: 24, 128>}, {pipeline_mode = #tpu.pipeline_mode<synchronous>, transform_indices = @transform_2, window_bounds = array<i64: 1, 128>}, {pipeline_mode = #tpu.pipeline_mode<synchronous>, transform_indices = @transform_3, window_bounds = array<i64: 128, 128>}, {pipeline_mode = #tpu.pipeline_mode<synchronous>, transform_indices = @transform_4, window_bounds = array<i64: 1, 128>}, {pipeline_mode = #tpu.pipeline_mode<synchronous>, transform_indices = @transform_5, window_bounds = array<i64: 128, 6>}, {pipeline_mode = #tpu.pipeline_mode<synchronous>, transform_indices = @transform_6, window_bounds = array<i64: 1, 6>}, {transform_indices = @transform_7, window_bounds = array<i64: 200, 6>}]} {
    %c0 = arith.constant 0 : index
    %c0_0 = arith.constant 0 : index
    %0 = vector.load %arg1[%c0, %c0_0] : memref<200x24xf32, #tpu.memory_space<vmem>>, vector<200x24xf32>
    %c0_1 = arith.constant 0 : index
    %c0_2 = arith.constant 0 : index
    %1 = vector.load %arg2[%c0_1, %c0_2] : memref<24x128xf32, #tpu.memory_space<vmem>>, vector<24x128xf32>
    %cst = arith.constant dense<0.000000e+00> : vector<200x128xf32>
    %2 = tpu.matmul %0, %1, %cst {dimension_numbers = #tpu.dot_dimension_numbers<[1], [0], [0], [1], [0, 0, 1, 1], [], []>} : vector<200x24xf32>, vector<24x128xf32>, vector<200x128xf32> -> vector<200x128xf32>
    %c0_3 = arith.constant 0 : index
    %c0_4 = arith.constant 0 : index
    %3 = vector.load %arg3[%c0_3, %c0_4] : memref<1x128xf32, #tpu.memory_space<vmem>>, vector<1x128xf32>
    %4 = vector.broadcast %3 : vector<1x128xf32> to vector<200x128xf32>
    %5 = arith.addf %2, %4 : vector<200x128xf32>
    %cst_5 = arith.constant 0.000000e+00 : f32
    %6 = vector.broadcast %cst_5 : f32 to vector<200x128xf32>
    %7 = arith.maximumf %5, %6 : vector<200x128xf32>
    %c0_6 = arith.constant 0 : index
    %c0_7 = arith.constant 0 : index
    %8 = vector.load %arg4[%c0_6, %c0_7] : memref<128x128xf32, #tpu.memory_space<vmem>>, vector<128x128xf32>
    %cst_8 = arith.constant dense<0.000000e+00> : vector<200x128xf32>
    %9 = tpu.matmul %7, %8, %cst_8 {dimension_numbers = #tpu.dot_dimension_numbers<[1], [0], [0], [1], [0, 0, 1, 1], [], []>} : vector<200x128xf32>, vector<128x128xf32>, vector<200x128xf32> -> vector<200x128xf32>
    %c0_9 = arith.constant 0 : index
    %c0_10 = arith.constant 0 : index
    %10 = vector.load %arg5[%c0_9, %c0_10] : memref<1x128xf32, #tpu.memory_space<vmem>>, vector<1x128xf32>
    %11 = vector.broadcast %10 : vector<1x128xf32> to vector<200x128xf32>
    %12 = arith.addf %9, %11 : vector<200x128xf32>
    %cst_11 = arith.constant 0.000000e+00 : f32
    %13 = vector.broadcast %cst_11 : f32 to vector<200x128xf32>
    %14 = arith.maximumf %12, %13 : vector<200x128xf32>
    %c0_12 = arith.constant 0 : index
    %c0_13 = arith.constant 0 : index
    %15 = vector.load %arg6[%c0_12, %c0_13] : memref<128x6xf32, #tpu.memory_space<vmem>>, vector<128x6xf32>
    %cst_14 = arith.constant dense<0.000000e+00> : vector<200x6xf32>
    %16 = tpu.matmul %14, %15, %cst_14 {dimension_numbers = #tpu.dot_dimension_numbers<[1], [0], [0], [1], [0, 0, 1, 1], [], []>} : vector<200x128xf32>, vector<128x6xf32>, vector<200x6xf32> -> vector<200x6xf32>
    %c0_15 = arith.constant 0 : index
    %c0_16 = arith.constant 0 : index
    %17 = vector.load %arg7[%c0_15, %c0_16] : memref<1x6xf32, #tpu.memory_space<vmem>>, vector<1x6xf32>
    %18 = vector.broadcast %17 : vector<1x6xf32> to vector<200x6xf32>
    %19 = arith.addf %16, %18 : vector<200x6xf32>
    %c0_17 = arith.constant 0 : index
    %c0_18 = arith.constant 0 : index
    %20 = vector.load %arg8[%c0_17, %c0_18] : memref<200x6xf32, #tpu.memory_space<vmem>>, vector<200x6xf32>
    tpu.vector_store %arg8[%c0_17, %c0_18], %19 {strides = array<i32>} : memref<200x6xf32, #tpu.memory_space<vmem>>, vector<200x6xf32>,
    return
  }
  func.func @transform_0(%arg0: i32) -> (i32, i32) {
    %c0_i32 = arith.constant 0 : i32
    %c0_i32_0 = arith.constant 0 : i32
    return %arg0, %c0_i32 : i32, i32
  }
  func.func @transform_1(%arg0: i32) -> (i32, i32) {
    %c0_i32 = arith.constant 0 : i32
    %c0_i32_0 = arith.constant 0 : i32
    %c0_i32_1 = arith.constant 0 : i32
    return %c0_i32, %c0_i32_0 : i32, i32
  }
  func.func @transform_2(%arg0: i32) -> (i32, i32) {
    %c0_i32 = arith.constant 0 : i32
    %c0_i32_0 = arith.constant 0 : i32
    %c0_i32_1 = arith.constant 0 : i32
    return %c0_i32, %c0_i32_0 : i32, i32
  }
  func.func @transform_3(%arg0: i32) -> (i32, i32) {
    %c0_i32 = arith.constant 0 : i32
    %c0_i32_0 = arith.constant 0 : i32
    %c0_i32_1 = arith.constant 0 : i32
    return %c0_i32, %c0_i32_0 : i32, i32
  }
  func.func @transform_4(%arg0: i32) -> (i32, i32) {
    %c0_i32 = arith.constant 0 : i32
    %c0_i32_0 = arith.constant 0 : i32
    %c0_i32_1 = arith.constant 0 : i32
    return %c0_i32, %c0_i32_0 : i32, i32
  }
  func.func @transform_5(%arg0: i32) -> (i32, i32) {
    %c0_i32 = arith.constant 0 : i32
    %c0_i32_0 = arith.constant 0 : i32
    %c0_i32_1 = arith.constant 0 : i32
    return %c0_i32, %c0_i32_0 : i32, i32
  }
  func.func @transform_6(%arg0: i32) -> (i32, i32) {
    %c0_i32 = arith.constant 0 : i32
    %c0_i32_0 = arith.constant 0 : i32
    %c0_i32_1 = arith.constant 0 : i32
    return %c0_i32, %c0_i32_0 : i32, i32
  }
  func.func @transform_7(%arg0: i32) -> (i32, i32) {
    %c0_i32 = arith.constant 0 : i32
    %c0_i32_0 = arith.constant 0 : i32
    return %arg0, %c0_i32 : i32, i32
  }
}

</mosaic_0001>

<llo_original>
// kernel: actor_forward.1
$region0: #{actor_forward.1}
  #allocation0 [shape = 'u32[]', space=smem, size = 0x4, offset = 0x4, fixed_abs, tag = 'smem constant byte address 0x4 - core index']
  #allocation1 [shape = 'u32[72,128]{1,0:T(1,128)}', space=vmem, size = 0x9000, scoped, tag = 'internal scratch']
  %s0 = inlined_call_operand.vmem [shape: f32[200,24], index: 0, kind: input, shape index: {}]
  %s1 = inlined_call_operand.vmem [shape: f32[24,128], index: 1, kind: input, shape index: {}]
  %s2 = inlined_call_operand.vmem [shape: f32[1,128], index: 2, kind: input, shape index: {}]
  %s3 = inlined_call_operand.vmem [shape: f32[128,128], index: 3, kind: input, shape index: {}]
  %s4 = inlined_call_operand.vmem [shape: f32[1,128], index: 4, kind: input, shape index: {}]
  %s5 = inlined_call_operand.vmem [shape: f32[128,6], index: 5, kind: input, shape index: {}]
  %s6 = inlined_call_operand.vmem [shape: f32[1,6], index: 6, kind: input, shape index: {}]
  %s7 = inlined_call_operand.vmem [shape: f32[200,6], index: 7, kind: output, shape index: {}]
  %s8 = sld [smem:[#allocation0]]
  $region38: #{actor_forward.1} parent=0
    _
  %s10 = ssub.s32 1, %s8
  %s11 = scalar_select 0, %s10, %s8
  // Predicated region
  $region2: #{actor_forward.1} parent=0 // pred_check
    _
  $region3: #{actor_forward.1} parent=0 // pred_check_branch
    %13 = sbr.rel (0) target = $region5
  $region4: #{actor_forward.1} parent=0 // pred_region
    _
  $region5: #{actor_forward.1} parent=0 // pred_fallthru
    _
  // Predicated region
  $region6: #{actor_forward.1} parent=0 // pred_check
    _
  $region7: #{actor_forward.1} parent=0 // pred_check_branch
    %15 = sbr.rel (0) target = $region9
  $region8: #{actor_forward.1} parent=0 // pred_region
    _
  $region9: #{actor_forward.1} parent=0 // pred_fallthru
    _
  // Predicated region
  $region10: #{actor_forward.1} parent=0 // pred_check
    _
  $region11: #{actor_forward.1} parent=0 // pred_check_branch
    %17 = sbr.rel (0) target = $region13
  $region12: #{actor_forward.1} parent=0 // pred_region
    _
  $region13: #{actor_forward.1} parent=0 // pred_fallthru
    _
  // Predicated region
  $region14: #{actor_forward.1} parent=0 // pred_check
    _
  $region15: #{actor_forward.1} parent=0 // pred_check_branch
    %19 = sbr.rel (0) target = $region17
  $region16: #{actor_forward.1} parent=0 // pred_region
    _
  $region17: #{actor_forward.1} parent=0 // pred_fallthru
    _
  // Predicated region
  $region18: #{actor_forward.1} parent=0 // pred_check
    _
  $region19: #{actor_forward.1} parent=0 // pred_check_branch
    %21 = sbr.rel (0) target = $region21
  $region20: #{actor_forward.1} parent=0 // pred_region
    _
  $region21: #{actor_forward.1} parent=0 // pred_fallthru
    _
  // Predicated region
  $region22: #{actor_forward.1} parent=0 // pred_check
    _
  $region23: #{actor_forward.1} parent=0 // pred_check_branch
    %23 = sbr.rel (0) target = $region25
  $region24: #{actor_forward.1} parent=0 // pred_region
    _
  $region25: #{actor_forward.1} parent=0 // pred_fallthru
    _
  // Predicated region
  $region26: #{actor_forward.1} parent=0 // pred_check
    _
  $region27: #{actor_forward.1} parent=0 // pred_check_branch
    %25 = sbr.rel (0) target = $region29
  $region28: #{actor_forward.1} parent=0 // pred_region
    _
  $region29: #{actor_forward.1} parent=0 // pred_fallthru
    _
  %v26 = vld [vmem:[%s0] sm:$0xff]
  %v27 = vld [vmem:[%s0 + $0x8] sm:$0xff]
  %v28 = vld [vmem:[%s0 + $0x10] sm:$0xff]
  %v29 = vld [vmem:[%s0 + $0x18] sm:$0xff]
  %v30 = vld [vmem:[%s0 + $0x20] sm:$0xff]
  %v31 = vld [vmem:[%s0 + $0x28] sm:$0xff]
  %v32 = vld [vmem:[%s0 + $0x30] sm:$0xff]
  %v33 = vld [vmem:[%s0 + $0x38] sm:$0xff]
  %v34 = vld [vmem:[%s0 + $0x40] sm:$0xff]
  %v35 = vld [vmem:[%s0 + $0x48] sm:$0xff]
  %v36 = vld [vmem:[%s0 + $0x50] sm:$0xff]
  %v37 = vld [vmem:[%s0 + $0x58] sm:$0xff]
  %v38 = vld [vmem:[%s0 + $0x60] sm:$0xff]
  %v39 = vld [vmem:[%s0 + $0x68] sm:$0xff]
  %v40 = vld [vmem:[%s0 + $0x70] sm:$0xff]
  %v41 = vld [vmem:[%s0 + $0x78] sm:$0xff]
  %v42 = vld [vmem:[%s0 + $0x80] sm:$0xff]
  %v43 = vld [vmem:[%s0 + $0x88] sm:$0xff]
  %v44 = vld [vmem:[%s0 + $0x90] sm:$0xff]
  %v45 = vld [vmem:[%s0 + $0x98] sm:$0xff]
  %v46 = vld [vmem:[%s0 + $0xa0] sm:$0xff]
  %v47 = vld [vmem:[%s0 + $0xa8] sm:$0xff]
  %v48 = vld [vmem:[%s0 + $0xb0] sm:$0xff]
  %v49 = vld [vmem:[%s0 + $0xb8] sm:$0xff]
  %v50 = vld [vmem:[%s0 + $0xc0] sm:$0xff]
  %v51 = vld [vmem:[%s1] sm:$0xff]
  %v52 = vld [vmem:[%s1 + $0x8] sm:$0xff]
  %v53 = vld [vmem:[%s1 + $0x10] sm:$0xff]
  %v54 = vld [vmem:[%s2] sm:$0x1]
  %v56 = vperm.slane %v54, 0
  %vm58 = vcmask 195584
  %v60 = vsel %vm58, %v26, 0
  %v63 = vsel %vm58, %v27, 0
  %v66 = vsel %vm58, %v28, 0
  %v69 = vsel %vm58, %v29, 0
  %v72 = vsel %vm58, %v30, 0
  %v75 = vsel %vm58, %v31, 0
  %v78 = vsel %vm58, %v32, 0
  %v81 = vsel %vm58, %v33, 0
  %v84 = vsel %vm58, %v34, 0
  %v87 = vsel %vm58, %v35, 0
  %v90 = vsel %vm58, %v36, 0
  %v93 = vsel %vm58, %v37, 0
  %v96 = vsel %vm58, %v38, 0
  %v99 = vsel %vm58, %v39, 0
  %v102 = vsel %vm58, %v40, 0
  %v105 = vsel %vm58, %v41, 0
  %v108 = vsel %vm58, %v42, 0
  %v111 = vsel %vm58, %v43, 0
  %v114 = vsel %vm58, %v44, 0
  %v117 = vsel %vm58, %v45, 0
  %v120 = vsel %vm58, %v46, 0
  %v123 = vsel %vm58, %v47, 0
  %v126 = vsel %vm58, %v48, 0
  %v129 = vsel %vm58, %v49, 0
  %v132 = vsel %vm58, %v50, 0
  %134 = vmatpush.msra.mxu0 0.0
  %135 = vmatpush.msra.mxu0 0.0
  %136 = vmatpush.msra.mxu0 0.0
  %137 = vmatpush.msra.mxu0 0.0
  %138 = vmatpush.msra.mxu0 0.0
  %139 = vmatpush.msra.mxu0 0.0
  %140 = vmatpush.msra.mxu0 0.0
  %141 = vmatpush.msra.mxu0 0.0
  %142 = vmatpush.msra.mxu0 0.0
  %143 = vmatpush.msra.mxu0 0.0
  %144 = vmatpush.msra.mxu0 0.0
  %145 = vmatpush.msra.mxu0 0.0
  %146 = vmatpush.msra.mxu0 0.0
  %147 = vmatpush.msra.mxu0 %v53
  %148 = vmatpush.msra.mxu0 %v52
  %149 = vmatpush.msra.mxu0 %v51
  %150 = vmatmul.f32.gmra.mxu0 %v60
  %v151 = vpop.f32.mrf.mxu0
  %v152 = vadd.f32 %v56, %v151
  %153 = vmatmul.f32.gmra.mxu0 %v63
  %v154 = vpop.f32.mrf.mxu0
  %v155 = vadd.f32 %v56, %v154
  %156 = vmatmul.f32.gmra.mxu0 %v66
  %v157 = vpop.f32.mrf.mxu0
  %v158 = vadd.f32 %v56, %v157
  %159 = vmatmul.f32.gmra.mxu0 %v69
  %v160 = vpop.f32.mrf.mxu0
  %v161 = vadd.f32 %v56, %v160
  %162 = vmatmul.f32.gmra.mxu0 %v72
  %v163 = vpop.f32.mrf.mxu0
  %v164 = vadd.f32 %v56, %v163
  %165 = vmatmul.f32.gmra.mxu0 %v75
  %v166 = vpop.f32.mrf.mxu0
  %v167 = vadd.f32 %v56, %v166
  %168 = vmatmul.f32.gmra.mxu0 %v78
  %v169 = vpop.f32.mrf.mxu0
  %v170 = vadd.f32 %v56, %v169
  %171 = vmatmul.f32.gmra.mxu0 %v81
  %v172 = vpop.f32.mrf.mxu0
  %v173 = vadd.f32 %v56, %v172
  %174 = vmatmul.f32.gmra.mxu0 %v84
  %v175 = vpop.f32.mrf.mxu0
  %v176 = vadd.f32 %v56, %v175
  %177 = vmatmul.f32.gmra.mxu0 %v87
  %v178 = vpop.f32.mrf.mxu0
  %v179 = vadd.f32 %v56, %v178
  %180 = vmatmul.f32.gmra.mxu0 %v90
  %v181 = vpop.f32.mrf.mxu0
  %v182 = vadd.f32 %v56, %v181
  %183 = vmatmul.f32.gmra.mxu0 %v93
  %v184 = vpop.f32.mrf.mxu0
  %v185 = vadd.f32 %v56, %v184
  %186 = vmatmul.f32.gmra.mxu0 %v96
  %v187 = vpop.f32.mrf.mxu0
  %v188 = vadd.f32 %v56, %v187
  %189 = vmatmul.f32.gmra.mxu0 %v99
  %v190 = vpop.f32.mrf.mxu0
  %v191 = vadd.f32 %v56, %v190
  %192 = vmatmul.f32.gmra.mxu0 %v102
  %v193 = vpop.f32.mrf.mxu0
  %v194 = vadd.f32 %v56, %v193
  %195 = vmatmul.f32.gmra.mxu0 %v105
  %v196 = vpop.f32.mrf.mxu0
  %v197 = vadd.f32 %v56, %v196
  %198 = vmatmul.f32.gmra.mxu0 %v108
  %v199 = vpop.f32.mrf.mxu0
  %v200 = vadd.f32 %v56, %v199
  %201 = vmatmul.f32.gmra.mxu0 %v111
  %v202 = vpop.f32.mrf.mxu0
  %v203 = vadd.f32 %v56, %v202
  %204 = vmatmul.f32.gmra.mxu0 %v114
  %v205 = vpop.f32.mrf.mxu0
  %v206 = vadd.f32 %v56, %v205
  %207 = vmatmul.f32.gmra.mxu0 %v117
  %v208 = vpop.f32.mrf.mxu0
  %v209 = vadd.f32 %v56, %v208
  %210 = vmatmul.f32.gmra.mxu0 %v120
  %v211 = vpop.f32.mrf.mxu0
  %v212 = vadd.f32 %v56, %v211
  %213 = vmatmul.f32.gmra.mxu0 %v123
  %v214 = vpop.f32.mrf.mxu0
  %v215 = vadd.f32 %v56, %v214
  %216 = vmatmul.f32.gmra.mxu0 %v126
  %v217 = vpop.f32.mrf.mxu0
  %v218 = vadd.f32 %v56, %v217
  %219 = vmatmul.f32.gmra.mxu0 %v129
  %v220 = vpop.f32.mrf.mxu0
  %v221 = vadd.f32 %v56, %v220
  %222 = vmatmul.f32.gmra.mxu0 %v132
  %v223 = vpop.f32.mrf.mxu0
  %v224 = vadd.f32 %v56, %v223
  %225 = vdwg.mxu0
  %v226 = vmax.f32 %v152, 0.0
  %v227 = vmax.f32 %v155, 0.0
  %v228 = vmax.f32 %v158, 0.0
  %v229 = vmax.f32 %v161, 0.0
  %v230 = vmax.f32 %v164, 0.0
  %v231 = vmax.f32 %v167, 0.0
  %v232 = vmax.f32 %v170, 0.0
  %v233 = vmax.f32 %v173, 0.0
  %v234 = vmax.f32 %v176, 0.0
  %v235 = vmax.f32 %v179, 0.0
  %v236 = vmax.f32 %v182, 0.0
  %v237 = vmax.f32 %v185, 0.0
  %v238 = vmax.f32 %v188, 0.0
  %v239 = vmax.f32 %v191, 0.0
  %v240 = vmax.f32 %v194, 0.0
  %v241 = vmax.f32 %v197, 0.0
  %v242 = vmax.f32 %v200, 0.0
  %v243 = vmax.f32 %v203, 0.0
  %v244 = vmax.f32 %v206, 0.0
  %v245 = vmax.f32 %v209, 0.0
  %v246 = vmax.f32 %v212, 0.0
  %v247 = vmax.f32 %v215, 0.0
  %v248 = vmax.f32 %v218, 0.0
  %v249 = vmax.f32 %v221, 0.0
  %v250 = vmax.f32 %v224, 0.0
  %v251 = vld [vmem:[%s3] sm:$0xff]
  %v252 = vld [vmem:[%s3 + $0x8] sm:$0xff]
  %v253 = vld [vmem:[%s3 + $0x10] sm:$0xff]
  %v254 = vld [vmem:[%s3 + $0x18] sm:$0xff]
  %v255 = vld [vmem:[%s3 + $0x20] sm:$0xff]
  %v256 = vld [vmem:[%s3 + $0x28] sm:$0xff]
  %v257 = vld [vmem:[%s3 + $0x30] sm:$0xff]
  %v258 = vld [vmem:[%s3 + $0x38] sm:$0xff]
  %v259 = vld [vmem:[%s3 + $0x40] sm:$0xff]
  %v260 = vld [vmem:[%s3 + $0x48] sm:$0xff]
  %v261 = vld [vmem:[%s3 + $0x50] sm:$0xff]
  %v262 = vld [vmem:[%s3 + $0x58] sm:$0xff]
  %v263 = vld [vmem:[%s3 + $0x60] sm:$0xff]
  %v264 = vld [vmem:[%s3 + $0x68] sm:$0xff]
  %v265 = vld [vmem:[%s3 + $0x70] sm:$0xff]
  %v266 = vld [vmem:[%s3 + $0x78] sm:$0xff]
  %v267 = vld [vmem:[%s4] sm:$0x1]
  %v269 = vperm.slane %v267, 0
  %271 = vmatpush.msra.mxu0 %v266
  %272 = vmatpush.msra.mxu0 %v265
  %273 = vmatpush.msra.mxu0 %v264
  %274 = vmatpush.msra.mxu0 %v263
  %275 = vmatpush.msra.mxu0 %v262
  %276 = vmatpush.msra.mxu0 %v261
  %277 = vmatpush.msra.mxu0 %v260
  %278 = vmatpush.msra.mxu0 %v259
  %279 = vmatpush.msra.mxu0 %v258
  %280 = vmatpush.msra.mxu0 %v257
  %281 = vmatpush.msra.mxu0 %v256
  %282 = vmatpush.msra.mxu0 %v255
  %283 = vmatpush.msra.mxu0 %v254
  %284 = vmatpush.msra.mxu0 %v253
  %285 = vmatpush.msra.mxu0 %v252
  %286 = vmatpush.msra.mxu0 %v251
  %287 = vmatmul.f32.gmra.mxu0 %v226
  %v288 = vpop.f32.mrf.mxu0
  %v289 = vadd.f32 %v269, %v288
  %290 = vmatmul.f32.gmra.mxu0 %v227
  %v291 = vpop.f32.mrf.mxu0
  %v292 = vadd.f32 %v269, %v291
  %293 = vmatmul.f32.gmra.mxu0 %v228
  %v294 = vpop.f32.mrf.mxu0
  %v295 = vadd.f32 %v269, %v294
  %296 = vmatmul.f32.gmra.mxu0 %v229
  %v297 = vpop.f32.mrf.mxu0
  %v298 = vadd.f32 %v269, %v297
  %299 = vmatmul.f32.gmra.mxu0 %v230
  %v300 = vpop.f32.mrf.mxu0
  %v301 = vadd.f32 %v269, %v300
  %302 = vmatmul.f32.gmra.mxu0 %v231
  %v303 = vpop.f32.mrf.mxu0
  %v304 = vadd.f32 %v269, %v303
  %305 = vmatmul.f32.gmra.mxu0 %v232
  %v306 = vpop.f32.mrf.mxu0
  %v307 = vadd.f32 %v269, %v306
  %308 = vmatmul.f32.gmra.mxu0 %v233
  %v309 = vpop.f32.mrf.mxu0
  %v310 = vadd.f32 %v269, %v309
  %311 = vmatmul.f32.gmra.mxu0 %v234
  %v312 = vpop.f32.mrf.mxu0
  %v313 = vadd.f32 %v269, %v312
  %314 = vmatmul.f32.gmra.mxu0 %v235
  %v315 = vpop.f32.mrf.mxu0
  %v316 = vadd.f32 %v269, %v315
  %317 = vmatmul.f32.gmra.mxu0 %v236
  %v318 = vpop.f32.mrf.mxu0
  %v319 = vadd.f32 %v269, %v318
  %320 = vmatmul.f32.gmra.mxu0 %v237
  %v321 = vpop.f32.mrf.mxu0
  %v322 = vadd.f32 %v269, %v321
  %323 = vmatmul.f32.gmra.mxu0 %v238
  %v324 = vpop.f32.mrf.mxu0
  %v325 = vadd.f32 %v269, %v324
  %326 = vmatmul.f32.gmra.mxu0 %v239
  %v327 = vpop.f32.mrf.mxu0
  %v328 = vadd.f32 %v269, %v327
  %329 = vmatmul.f32.gmra.mxu0 %v240
  %v330 = vpop.f32.mrf.mxu0
  %v331 = vadd.f32 %v269, %v330
  %332 = vmatmul.f32.gmra.mxu0 %v241
  %v333 = vpop.f32.mrf.mxu0
  %v334 = vadd.f32 %v269, %v333
  %335 = vmatmul.f32.gmra.mxu0 %v242
  %v336 = vpop.f32.mrf.mxu0
  %v337 = vadd.f32 %v269, %v336
  %338 = vmatmul.f32.gmra.mxu0 %v243
  %v339 = vpop.f32.mrf.mxu0
  %v340 = vadd.f32 %v269, %v339
  %341 = vmatmul.f32.gmra.mxu0 %v244
  %v342 = vpop.f32.mrf.mxu0
  %v343 = vadd.f32 %v269, %v342
  %344 = vmatmul.f32.gmra.mxu0 %v245
  %v345 = vpop.f32.mrf.mxu0
  %v346 = vadd.f32 %v269, %v345
  %347 = vmatmul.f32.gmra.mxu0 %v246
  %v348 = vpop.f32.mrf.mxu0
  %v349 = vadd.f32 %v269, %v348
  %350 = vmatmul.f32.gmra.mxu0 %v247
  %v351 = vpop.f32.mrf.mxu0
  %v352 = vadd.f32 %v269, %v351
  %353 = vmatmul.f32.gmra.mxu0 %v248
  %v354 = vpop.f32.mrf.mxu0
  %v355 = vadd.f32 %v269, %v354
  %356 = vmatmul.f32.gmra.mxu0 %v249
  %v357 = vpop.f32.mrf.mxu0
  %v358 = vadd.f32 %v269, %v357
  %359 = vmatmul.f32.gmra.mxu0 %v250
  %v360 = vpop.f32.mrf.mxu0
  %v361 = vadd.f32 %v269, %v360
  %362 = vdwg.mxu0
  %v363 = vmax.f32 %v289, 0.0
  %v364 = vmax.f32 %v292, 0.0
  %v365 = vmax.f32 %v295, 0.0
  %v366 = vmax.f32 %v298, 0.0
  %v367 = vmax.f32 %v301, 0.0
  %v368 = vmax.f32 %v304, 0.0
  %v369 = vmax.f32 %v307, 0.0
  %v370 = vmax.f32 %v310, 0.0
  %v371 = vmax.f32 %v313, 0.0
  %v372 = vmax.f32 %v316, 0.0
  %v373 = vmax.f32 %v319, 0.0
  %v374 = vmax.f32 %v322, 0.0
  %v375 = vmax.f32 %v325, 0.0
  %v376 = vmax.f32 %v328, 0.0
  %v377 = vmax.f32 %v331, 0.0
  %v378 = vmax.f32 %v334, 0.0
  %v379 = vmax.f32 %v337, 0.0
  %v380 = vmax.f32 %v340, 0.0
  %v381 = vmax.f32 %v343, 0.0
  %v382 = vmax.f32 %v346, 0.0
  %v383 = vmax.f32 %v349, 0.0
  %v384 = vmax.f32 %v352, 0.0
  %v385 = vmax.f32 %v355, 0.0
  %v386 = vmax.f32 %v358, 0.0
  %v387 = vmax.f32 %v361, 0.0
  %v388 = vld [vmem:[%s5] sm:$0xff]
  %v389 = vld [vmem:[%s5 + $0x8] sm:$0xff]
  %v390 = vld [vmem:[%s5 + $0x10] sm:$0xff]
  %v391 = vld [vmem:[%s5 + $0x18] sm:$0xff]
  %v392 = vld [vmem:[%s5 + $0x20] sm:$0xff]
  %v393 = vld [vmem:[%s5 + $0x28] sm:$0xff]
  %v394 = vld [vmem:[%s5 + $0x30] sm:$0xff]
  %v395 = vld [vmem:[%s5 + $0x38] sm:$0xff]
  %v396 = vld [vmem:[%s5 + $0x40] sm:$0xff]
  %v397 = vld [vmem:[%s5 + $0x48] sm:$0xff]
  %v398 = vld [vmem:[%s5 + $0x50] sm:$0xff]
  %v399 = vld [vmem:[%s5 + $0x58] sm:$0xff]
  %v400 = vld [vmem:[%s5 + $0x60] sm:$0xff]
  %v401 = vld [vmem:[%s5 + $0x68] sm:$0xff]
  %v402 = vld [vmem:[%s5 + $0x70] sm:$0xff]
  %v403 = vld [vmem:[%s5 + $0x78] sm:$0xff]
  %v404 = vld [vmem:[%s6] sm:$0x1]
  %v406 = vperm.slane %v404, 0
  %408 = vmatpush.msra.mxu0 %v403
  %409 = vmatpush.msra.mxu0 %v402
  %410 = vmatpush.msra.mxu0 %v401
  %411 = vmatpush.msra.mxu0 %v400
  %412 = vmatpush.msra.mxu0 %v399
  %413 = vmatpush.msra.mxu0 %v398
  %414 = vmatpush.msra.mxu0 %v397
  %415 = vmatpush.msra.mxu0 %v396
  %416 = vmatpush.msra.mxu0 %v395
  %417 = vmatpush.msra.mxu0 %v394
  %418 = vmatpush.msra.mxu0 %v393
  %419 = vmatpush.msra.mxu0 %v392
  %420 = vmatpush.msra.mxu0 %v391
  %421 = vmatpush.msra.mxu0 %v390
  %422 = vmatpush.msra.mxu0 %v389
  %423 = vmatpush.msra.mxu0 %v388
  %424 = vmatmul.f32.gmra.mxu0 %v363
  %v425 = vpop.f32.mrf.mxu0
  %v426 = vadd.f32 %v406, %v425
  %427 = vmatmul.f32.gmra.mxu0 %v364
  %v428 = vpop.f32.mrf.mxu0
  %v429 = vadd.f32 %v406, %v428
  %430 = vmatmul.f32.gmra.mxu0 %v365
  %v431 = vpop.f32.mrf.mxu0
  %v432 = vadd.f32 %v406, %v431
  %433 = vmatmul.f32.gmra.mxu0 %v366
  %v434 = vpop.f32.mrf.mxu0
  %v435 = vadd.f32 %v406, %v434
  %436 = vmatmul.f32.gmra.mxu0 %v367
  %v437 = vpop.f32.mrf.mxu0
  %v438 = vadd.f32 %v406, %v437
  %439 = vmatmul.f32.gmra.mxu0 %v368
  %v440 = vpop.f32.mrf.mxu0
  %v441 = vadd.f32 %v406, %v440
  %442 = vmatmul.f32.gmra.mxu0 %v369
  %v443 = vpop.f32.mrf.mxu0
  %v444 = vadd.f32 %v406, %v443
  %445 = vmatmul.f32.gmra.mxu0 %v370
  %v446 = vpop.f32.mrf.mxu0
  %v447 = vadd.f32 %v406, %v446
  %448 = vmatmul.f32.gmra.mxu0 %v371
  %v449 = vpop.f32.mrf.mxu0
  %v450 = vadd.f32 %v406, %v449
  %451 = vmatmul.f32.gmra.mxu0 %v372
  %v452 = vpop.f32.mrf.mxu0
  %v453 = vadd.f32 %v406, %v452
  %454 = vmatmul.f32.gmra.mxu0 %v373
  %v455 = vpop.f32.mrf.mxu0
  %v456 = vadd.f32 %v406, %v455
  %457 = vmatmul.f32.gmra.mxu0 %v374
  %v458 = vpop.f32.mrf.mxu0
  %v459 = vadd.f32 %v406, %v458
  %460 = vmatmul.f32.gmra.mxu0 %v375
  %v461 = vpop.f32.mrf.mxu0
  %v462 = vadd.f32 %v406, %v461
  %463 = vmatmul.f32.gmra.mxu0 %v376
  %v464 = vpop.f32.mrf.mxu0
  %v465 = vadd.f32 %v406, %v464
  %466 = vmatmul.f32.gmra.mxu0 %v377
  %v467 = vpop.f32.mrf.mxu0
  %v468 = vadd.f32 %v406, %v467
  %469 = vmatmul.f32.gmra.mxu0 %v378
  %v470 = vpop.f32.mrf.mxu0
  %v471 = vadd.f32 %v406, %v470
  %472 = vmatmul.f32.gmra.mxu0 %v379
  %v473 = vpop.f32.mrf.mxu0
  %v474 = vadd.f32 %v406, %v473
  %475 = vmatmul.f32.gmra.mxu0 %v380
  %v476 = vpop.f32.mrf.mxu0
  %v477 = vadd.f32 %v406, %v476
  %478 = vmatmul.f32.gmra.mxu0 %v381
  %v479 = vpop.f32.mrf.mxu0
  %v480 = vadd.f32 %v406, %v479
  %481 = vmatmul.f32.gmra.mxu0 %v382
  %v482 = vpop.f32.mrf.mxu0
  %v483 = vadd.f32 %v406, %v482
  %484 = vmatmul.f32.gmra.mxu0 %v383
  %v485 = vpop.f32.mrf.mxu0
  %v486 = vadd.f32 %v406, %v485
  %487 = vmatmul.f32.gmra.mxu0 %v384
  %v488 = vpop.f32.mrf.mxu0
  %v489 = vadd.f32 %v406, %v488
  %490 = vmatmul.f32.gmra.mxu0 %v385
  %v491 = vpop.f32.mrf.mxu0
  %v492 = vadd.f32 %v406, %v491
  %493 = vmatmul.f32.gmra.mxu0 %v386
  %v494 = vpop.f32.mrf.mxu0
  %v495 = vadd.f32 %v406, %v494
  %496 = vmatmul.f32.gmra.mxu0 %v387
  %v497 = vpop.f32.mrf.mxu0
  %v498 = vadd.f32 %v406, %v497
  %499 = vdwg.mxu0
  %vm500 = vcmask 48128
  %501 = vst.msk [vmem:[%s7] sm:$0xff] %vm500, %v426
  %502 = vst.msk [vmem:[%s7 + $0x8] sm:$0xff] %vm500, %v429
  %503 = vst.msk [vmem:[%s7 + $0x10] sm:$0xff] %vm500, %v432
  %504 = vst.msk [vmem:[%s7 + $0x18] sm:$0xff] %vm500, %v435
  %505 = vst.msk [vmem:[%s7 + $0x20] sm:$0xff] %vm500, %v438
  %506 = vst.msk [vmem:[%s7 + $0x28] sm:$0xff] %vm500, %v441
  %507 = vst.msk [vmem:[%s7 + $0x30] sm:$0xff] %vm500, %v444
  %508 = vst.msk [vmem:[%s7 + $0x38] sm:$0xff] %vm500, %v447
  %509 = vst.msk [vmem:[%s7 + $0x40] sm:$0xff] %vm500, %v450
  %510 = vst.msk [vmem:[%s7 + $0x48] sm:$0xff] %vm500, %v453
  %511 = vst.msk [vmem:[%s7 + $0x50] sm:$0xff] %vm500, %v456
  %512 = vst.msk [vmem:[%s7 + $0x58] sm:$0xff] %vm500, %v459
  %513 = vst.msk [vmem:[%s7 + $0x60] sm:$0xff] %vm500, %v462
  %514 = vst.msk [vmem:[%s7 + $0x68] sm:$0xff] %vm500, %v465
  %515 = vst.msk [vmem:[%s7 + $0x70] sm:$0xff] %vm500, %v468
  %516 = vst.msk [vmem:[%s7 + $0x78] sm:$0xff] %vm500, %v471
  %517 = vst.msk [vmem:[%s7 + $0x80] sm:$0xff] %vm500, %v474
  %518 = vst.msk [vmem:[%s7 + $0x88] sm:$0xff] %vm500, %v477
  %519 = vst.msk [vmem:[%s7 + $0x90] sm:$0xff] %vm500, %v480
  %520 = vst.msk [vmem:[%s7 + $0x98] sm:$0xff] %vm500, %v483
  %521 = vst.msk [vmem:[%s7 + $0xa0] sm:$0xff] %vm500, %v486
  %522 = vst.msk [vmem:[%s7 + $0xa8] sm:$0xff] %vm500, %v489
  %523 = vst.msk [vmem:[%s7 + $0xb0] sm:$0xff] %vm500, %v492
  %524 = vst.msk [vmem:[%s7 + $0xb8] sm:$0xff] %vm500, %v495
  %525 = vst.msk [vmem:[%s7 + $0xc0] sm:$0xff] %vm500, %v498
  // Predicated region
  $region30: #{actor_forward.1} parent=0 // pred_check
    _
  $region31: #{actor_forward.1} parent=0 // pred_check_branch
    %527 = sbr.rel (0) target = $region33
  $region32: #{actor_forward.1} parent=0 // pred_region
    _
  $region33: #{actor_forward.1} parent=0 // pred_fallthru
    _
  // Predicated region
  $region34: #{actor_forward.1} parent=0 // pred_check
    _
  $region35: #{actor_forward.1} parent=0 // pred_check_branch
    %529 = sbr.rel (0) target = $region37
  $region36: #{actor_forward.1} parent=0 // pred_region
    _
  $region37: #{actor_forward.1} parent=0 // pred_fallthru
    _

</llo_original>
